<compile_context>
chip_gen: v5e
topology: v5e:2x2
jax: 0.10.0
libtpu: 0.0.40
codegen_flags: <defaults>
</compile_context>

<pallas_src>
import jax
import jax.numpy as jnp
from jax import lax
from jax.experimental import pallas as pl
from jax.experimental.pallas import tpu as pltpu


def _make_graph_lookup_kernel(maskvalue, include_self, A, D, F, use_gather):
    off = 1 if include_self else 0

    def kernel(edges_ref, atoms_ref, out_ref):
        # edges_ref: VMEM (TB, A, D) int32    neighbor ids in [-1, A-1]
        # atoms_ref: VMEM (TB, A, F)          atom features
        # out_ref:   VMEM (TB, A, out_deg*F)  lane-dense output tile
        TB = atoms_ref.shape[0]

        if include_self:
            # Self rows -> lane slice [0, F): one dense slab store per tile.
            out_ref[:, :, 0:F] = atoms_ref[...].astype(out_ref.dtype)

        # Hoisted constant (never rebuilt inside the loop).
        mask_row = jnp.full((1, F), maskvalue, jnp.float32)

        def per_batch(b, carry):
            atoms_b = atoms_ref[b].astype(jnp.float32)              # (A, F)
            # Masked-atom table: row 0 = maskvalue, rows 1..A = atoms.
            table = jnp.concatenate([mask_row, atoms_b], axis=0)    # (A+1, F)
            edges_b = edges_ref[b]                                  # (A, D)

            for d in range(D):                 # static unroll; D is small
                idx = edges_b[:, d:d + 1] + 1                       # (A, 1) in [0, A]
                if use_gather:
                    # Vectorized dynamic gather of all A rows at once.
                    idx2 = jnp.broadcast_to(idx, (A, F))
                    rows = jnp.take_along_axis(table, idx2, axis=0,
                                               mode="promise_in_bounds")
                else:
                    # One-hot MXU matmul: exact selection (products are x*1.0
                    # or x*0.0; f32 accumulate), keeps VPU/XLU free.
                    cols = lax.broadcasted_iota(jnp.int32, (A, A + 1), 1)
                    onehot = (jnp.broadcast_to(idx, (A, A + 1)) == cols
                              ).astype(jnp.float32)
                    rows = jnp.dot(onehot, table,
                                   preferred_element_type=jnp.float32)
                # Dense (A, F) slab store at a static lane offset.
                out_ref[b, :, (d + off) * F:(d + off + 1) * F] = (
                    rows.astype(out_ref.dtype))
            return carry

        lax.fori_loop(0, TB, per_batch, 0)

    return kernel


def graph_lookup(atoms, edges, maskvalue=0.0, include_self=True, impl="auto"):
    """Pallas equivalent of GraphLookup.forward(atoms, edges)."""
    B, A, F = atoms.shape
    eB, eA, D = edges.shape
    assert (eB, eA) == (B, A), "atoms/edges batch or atom axis mismatch"
    out_deg = D + 1 if include_self else D

    edges_i = edges.astype(jnp.int32)
    itemsize = jnp.dtype(atoms.dtype).itemsize

    # Per-batch-element VMEM footprint: double-buffered atoms + output tiles,
    # the lane-padded int32 edge tile, plus headroom for in-kernel temporaries
    # (masked table / one-hot block).
    per_batch = (2 * A * F * itemsize
                 + 2 * A * out_deg * F * itemsize
                 + 2 * A * max(D, 128) * 4
                 + (A + 8) * max(F, A + 1) * 4)
    per_batch = per_batch * 5 // 4 + (64 << 10)

    # Generation-aware budget (v7x: 64 MiB VMEM; v5e/v6e: 128 MiB).
    try:
        vmem_cap = int(pltpu.get_tpu_info().vmem_capacity_bytes)
    except Exception:
        vmem_cap = 64 << 20          # conservative default if query unavailable
    tile_budget = max(2 << 20, min(vmem_cap // 5, 24 << 20))

    # Keep the grid >= 2 steps so both TensorCores get work on v7x.
    max_tb = B // 2 if B >= 2 else 1
    TB = 1
    for tb in range(1, max_tb + 1):
        if B % tb == 0 and tb * per_batch <= tile_budget:
            TB = tb
    grid = (B // TB,)

    # Explicit scoped-VMEM limit (raises v5e's 16 MiB default; stays well
    # under v7x's 64 MiB physical).  If even TB=1 exceeds this, the shape is
    # simply too large for a single block and needs feature tiling.
    vmem_limit = int(min(vmem_cap * 3 // 4, max(2 * TB * per_batch, 32 << 20)))

    def build_and_run(use_gather):
        kernel = _make_graph_lookup_kernel(
            float(maskvalue), include_self, A, D, F, use_gather)
        return pl.pallas_call(
            kernel,
            out_shape=jax.ShapeDtypeStruct((B, A, out_deg * F), atoms.dtype),
            grid_spec=pltpu.PrefetchScalarGridSpec(
                num_scalar_prefetch=0,
                grid=grid,
                in_specs=[pl.BlockSpec((TB, A, D), lambda b: (b, 0, 0)),
                          pl.BlockSpec((TB, A, F), lambda b: (b, 0, 0))],
                out_specs=pl.BlockSpec((TB, A, out_deg * F),
                                       lambda b: (b, 0, 0)),
            ),
            compiler_params=pltpu.CompilerParams(
                dimension_semantics=("parallel",),
                vmem_limit_bytes=vmem_limit),
        )(edges_i, atoms)

    if impl == "gather":
        out_flat = build_and_run(True)
    elif impl == "onehot":
        out_flat = build_and_run(False)
    else:
        # Prefer the Mosaic dynamic-gather path; fall back to the MXU one-hot
        # path on jax/TPU versions where this gather shape does not lower.
        # (Auto-detection happens eagerly; call with impl= explicitly if you
        # need to jit this wrapper.)
        try:
            out_flat = build_and_run(True)
            out_flat.block_until_ready()
        except Exception:
            out_flat = build_and_run(False)

    # Free (contiguous) reshape in HBM back to the PyTorch axis convention.
    return out_flat.reshape(B, A, out_deg, F)


def _reference_graph_lookup(atoms, edges, maskvalue=0.0, include_self=True):
    """Pure-JAX reference mirroring the PyTorch code."""
    B, A, F = atoms.shape
    mask_row = jnp.full((B, 1, F), maskvalue, atoms.dtype)
    masked_atoms = jnp.concatenate([mask_row, atoms], axis=1)   # (B, A+1, F)
    masked_edges = edges + 1                                    # (B, A, D)
    gathered = jax.vmap(lambda a, e: a[e])(masked_atoms, masked_edges)
    if include_self:
        return jnp.concatenate([atoms[:, :, None, :], gathered], axis=2)
    return gathered


if __name__ == "__main__":
    B, A, D, F = 2, 16, 4, 32   # batch, max_atoms, max_degree, atom features

    key = jax.random.PRNGKey(0)
    k_atoms, k_edges = jax.random.split(key)
    # Integer-valued float features keep the equality check exact on every
    # code path (dynamic gather and one-hot MXU fallback) and TPU generation.
    atoms = jax.random.randint(k_atoms, (B, A, F), -8, 9).astype(jnp.float32)
    # edges in [-1, A-1]; -1 means "no neighbor" (maps to the mask row).
    edges = jax.random.randint(k_edges, (B, A, D), -1, A, dtype=jnp.int32)

    out = graph_lookup(atoms, edges, maskvalue=0.0, include_self=True)
    out = jax.block_until_ready(out)
    ref = _reference_graph_lookup(atoms, edges, maskvalue=0.0, include_self=True)
    assert out.shape == (B, A, D + 1, F)
    assert jnp.array_equal(out, ref), "Pallas output mismatches reference"

    # Second config: non-zero mask value, no self rows.
    out2 = graph_lookup(atoms, edges, maskvalue=3.0, include_self=False)
    out2 = jax.block_until_ready(out2)
    ref2 = _reference_graph_lookup(atoms, edges, maskvalue=3.0, include_self=False)
    assert out2.shape == (B, A, D, F)
    assert jnp.array_equal(out2, ref2), "Pallas output mismatches reference (cfg2)"

    print("KERNEL_OK")
</pallas_src>

<mosaic_0001>
module attributes {stable_mosaic.version = 11 : i64} {
  func.func @kernel(%arg0: i32, %arg1: memref<1x16x4xi32, #tpu.memory_space<vmem>>, %arg2: memref<1x16x32xf32, #tpu.memory_space<vmem>>, %arg3: memref<1x16x160xf32, #tpu.memory_space<vmem>>) attributes {dimension_semantics = [#tpu.dimension_semantics<parallel>], iteration_bounds = array<i64: 2>, scalar_prefetch = 0 : i64, scratch_operands = 0 : i64, tpu.core_type = #tpu.core_type<tc>, window_params = [{transform_indices = @transform_0, window_bounds = array<i64: 1, 16, 4>}, {transform_indices = @transform_1, window_bounds = array<i64: 1, 16, 32>}, {transform_indices = @transform_2, window_bounds = array<i64: 1, 16, 160>}]} {
    %c0 = arith.constant 0 : index
    %c0_0 = arith.constant 0 : index
    %c0_1 = arith.constant 0 : index
    %0 = vector.load %arg2[%c0, %c0_0, %c0_1] : memref<1x16x32xf32, #tpu.memory_space<vmem>>, vector<1x16x32xf32>
    %c0_2 = arith.constant 0 : index
    %c0_3 = arith.constant 0 : index
    %c0_4 = arith.constant 0 : index
    %1 = vector.load %arg3[%c0_2, %c0_3, %c0_4] : memref<1x16x160xf32, #tpu.memory_space<vmem>>, vector<1x16x32xf32>
    tpu.vector_store %arg3[%c0_2, %c0_3, %c0_4], %0 {strides = array<i32>} : memref<1x16x160xf32, #tpu.memory_space<vmem>>, vector<1x16x32xf32>,
    %cst = arith.constant 0.000000e+00 : f32
    %2 = vector.broadcast %cst : f32 to vector<1x32xf32>
    %c0_i32 = arith.constant 0 : i32
    %3 = arith.index_cast %c0_i32 : i32 to index
    %c0_5 = arith.constant 0 : index
    %c0_6 = arith.constant 0 : index
    %4 = vector.load %arg2[%3, %c0_5, %c0_6] : memref<1x16x32xf32, #tpu.memory_space<vmem>>, vector<1x16x32xf32>
    %5 = vector.shape_cast %4 : vector<1x16x32xf32> to vector<16x32xf32>
    %6 = tpu.concatenate %2, %5 in 0 : vector<1x32xf32>, vector<16x32xf32> -> vector<17x32xf32>
    %7 = arith.index_cast %c0_i32 : i32 to index
    %c0_7 = arith.constant 0 : index
    %c0_8 = arith.constant 0 : index
    %8 = vector.load %arg1[%7, %c0_7, %c0_8] : memref<1x16x4xi32, #tpu.memory_space<vmem>>, vector<1x16x4xi32>
    %9 = vector.shape_cast %8 : vector<1x16x4xi32> to vector<16x4xi32>
    %10 = vector.extract_strided_slice %9 {offsets = [0, 0], sizes = [16, 1], strides = [1, 1]} : vector<16x4xi32> to vector<16x1xi32>
    %c1_i32 = arith.constant 1 : i32
    %11 = vector.broadcast %c1_i32 : i32 to vector<16x1xi32>
    %12 = arith.addi %10, %11 : vector<16x1xi32>
    %13 = vector.shape_cast %12 : vector<16x1xi32> to vector<16x1xi32>
    %14 = vector.broadcast %13 : vector<16x1xi32> to vector<16x32xi32>
    %15 = vector.shape_cast %14 : vector<16x32xi32> to vector<16x32x1xi32>
    %16 = vector.shape_cast %15 : vector<16x32x1xi32> to vector<16x32xi32>
    %17 = tpu.dynamic_gather %6[%16] in [0] : vector<17x32xf32>, vector<16x32xi32> -> vector<16x32xf32>
    %18 = arith.index_cast %c0_i32 : i32 to index
    %c0_9 = arith.constant 0 : index
    %c32 = arith.constant 32 : index
    %19 = vector.load %arg3[%18, %c0_9, %c32] : memref<1x16x160xf32, #tpu.memory_space<vmem>>, vector<1x16x32xf32>
    %20 = vector.shape_cast %19 : vector<1x16x32xf32> to vector<16x32xf32>
    %21 = vector.shape_cast %17 : vector<16x32xf32> to vector<1x16x32xf32>
    tpu.vector_store %arg3[%18, %c0_9, %c32], %21 {strides = array<i32>} : memref<1x16x160xf32, #tpu.memory_space<vmem>>, vector<1x16x32xf32>,
    %22 = vector.extract_strided_slice %9 {offsets = [0, 1], sizes = [16, 1], strides = [1, 1]} : vector<16x4xi32> to vector<16x1xi32>
    %c1_i32_10 = arith.constant 1 : i32
    %23 = vector.broadcast %c1_i32_10 : i32 to vector<16x1xi32>
    %24 = arith.addi %22, %23 : vector<16x1xi32>
    %25 = vector.shape_cast %24 : vector<16x1xi32> to vector<16x1xi32>
    %26 = vector.broadcast %25 : vector<16x1xi32> to vector<16x32xi32>
    %27 = vector.shape_cast %26 : vector<16x32xi32> to vector<16x32x1xi32>
    %28 = vector.shape_cast %27 : vector<16x32x1xi32> to vector<16x32xi32>
    %29 = tpu.dynamic_gather %6[%28] in [0] : vector<17x32xf32>, vector<16x32xi32> -> vector<16x32xf32>
    %30 = arith.index_cast %c0_i32 : i32 to index
    %c0_11 = arith.constant 0 : index
    %c64 = arith.constant 64 : index
    %31 = vector.load %arg3[%30, %c0_11, %c64] : memref<1x16x160xf32, #tpu.memory_space<vmem>>, vector<1x16x32xf32>
    %32 = vector.shape_cast %31 : vector<1x16x32xf32> to vector<16x32xf32>
    %33 = vector.shape_cast %29 : vector<16x32xf32> to vector<1x16x32xf32>
    tpu.vector_store %arg3[%30, %c0_11, %c64], %33 {strides = array<i32>} : memref<1x16x160xf32, #tpu.memory_space<vmem>>, vector<1x16x32xf32>,
    %34 = vector.extract_strided_slice %9 {offsets = [0, 2], sizes = [16, 1], strides = [1, 1]} : vector<16x4xi32> to vector<16x1xi32>
    %c1_i32_12 = arith.constant 1 : i32
    %35 = vector.broadcast %c1_i32_12 : i32 to vector<16x1xi32>
    %36 = arith.addi %34, %35 : vector<16x1xi32>
    %37 = vector.shape_cast %36 : vector<16x1xi32> to vector<16x1xi32>
    %38 = vector.broadcast %37 : vector<16x1xi32> to vector<16x32xi32>
    %39 = vector.shape_cast %38 : vector<16x32xi32> to vector<16x32x1xi32>
    %40 = vector.shape_cast %39 : vector<16x32x1xi32> to vector<16x32xi32>
    %41 = tpu.dynamic_gather %6[%40] in [0] : vector<17x32xf32>, vector<16x32xi32> -> vector<16x32xf32>
    %42 = arith.index_cast %c0_i32 : i32 to index
    %c0_13 = arith.constant 0 : index
    %c96 = arith.constant 96 : index
    %43 = vector.load %arg3[%42, %c0_13, %c96] : memref<1x16x160xf32, #tpu.memory_space<vmem>>, vector<1x16x32xf32>
    %44 = vector.shape_cast %43 : vector<1x16x32xf32> to vector<16x32xf32>
    %45 = vector.shape_cast %41 : vector<16x32xf32> to vector<1x16x32xf32>
    tpu.vector_store %arg3[%42, %c0_13, %c96], %45 {strides = array<i32>} : memref<1x16x160xf32, #tpu.memory_space<vmem>>, vector<1x16x32xf32>,
    %46 = vector.extract_strided_slice %9 {offsets = [0, 3], sizes = [16, 1], strides = [1, 1]} : vector<16x4xi32> to vector<16x1xi32>
    %c1_i32_14 = arith.constant 1 : i32
    %47 = vector.broadcast %c1_i32_14 : i32 to vector<16x1xi32>
    %48 = arith.addi %46, %47 : vector<16x1xi32>
    %49 = vector.shape_cast %48 : vector<16x1xi32> to vector<16x1xi32>
    %50 = vector.broadcast %49 : vector<16x1xi32> to vector<16x32xi32>
    %51 = vector.shape_cast %50 : vector<16x32xi32> to vector<16x32x1xi32>
    %52 = vector.shape_cast %51 : vector<16x32x1xi32> to vector<16x32xi32>
    %53 = tpu.dynamic_gather %6[%52] in [0] : vector<17x32xf32>, vector<16x32xi32> -> vector<16x32xf32>
    %54 = arith.index_cast %c0_i32 : i32 to index
    %c0_15 = arith.constant 0 : index
    %c128 = arith.constant 128 : index
    %55 = vector.load %arg3[%54, %c0_15, %c128] : memref<1x16x160xf32, #tpu.memory_space<vmem>>, vector<1x16x32xf32>
    %56 = vector.shape_cast %55 : vector<1x16x32xf32> to vector<16x32xf32>
    %57 = vector.shape_cast %53 : vector<16x32xf32> to vector<1x16x32xf32>
    tpu.vector_store %arg3[%54, %c0_15, %c128], %57 {strides = array<i32>} : memref<1x16x160xf32, #tpu.memory_space<vmem>>, vector<1x16x32xf32>,
    %c1_i32_16 = arith.constant 1 : i32
    return
  }
  func.func @transform_0(%arg0: i32) -> (i32, i32, i32) {
    %c0_i32 = arith.constant 0 : i32
    %c0_i32_0 = arith.constant 0 : i32
    %c0_i32_1 = arith.constant 0 : i32
    return %arg0, %c0_i32, %c0_i32_0 : i32, i32, i32
  }
  func.func @transform_1(%arg0: i32) -> (i32, i32, i32) {
    %c0_i32 = arith.constant 0 : i32
    %c0_i32_0 = arith.constant 0 : i32
    %c0_i32_1 = arith.constant 0 : i32
    return %arg0, %c0_i32, %c0_i32_0 : i32, i32, i32
  }
  func.func @transform_2(%arg0: i32) -> (i32, i32, i32) {
    %c0_i32 = arith.constant 0 : i32
    %c0_i32_0 = arith.constant 0 : i32
    %c0_i32_1 = arith.constant 0 : i32
    return %arg0, %c0_i32, %c0_i32_0 : i32, i32, i32
  }
}

module attributes {stable_mosaic.version = 11 : i64} {
  func.func @kernel(%arg0: i32, %arg1: memref<1x16x4xi32, #tpu.memory_space<vmem>>, %arg2: memref<1x16x32xf32, #tpu.memory_space<vmem>>, %arg3: memref<1x16x160xf32, #tpu.memory_space<vmem>>) attributes {dimension_semantics = [#tpu.dimension_semantics<parallel>], iteration_bounds = array<i64: 2>, scalar_prefetch = 0 : i64, scratch_operands = 0 : i64, tpu.core_type = #tpu.core_type<tc>, window_params = [{transform_indices = @transform_0, window_bounds = array<i64: 1, 16, 4>}, {transform_indices = @transform_1, window_bounds = array<i64: 1, 16, 32>}, {transform_indices = @transform_2, window_bounds = array<i64: 1, 16, 160>}]} {
    %c0 = arith.constant 0 : index
    %c0_0 = arith.constant 0 : index
    %c0_1 = arith.constant 0 : index
    %0 = vector.load %arg2[%c0, %c0_0, %c0_1] : memref<1x16x32xf32, #tpu.memory_space<vmem>>, vector<1x16x32xf32>
    %c0_2 = arith.constant 0 : index
    %c0_3 = arith.constant 0 : index
    %c0_4 = arith.constant 0 : index
    %1 = vector.load %arg3[%c0_2, %c0_3, %c0_4] : memref<1x16x160xf32, #tpu.memory_space<vmem>>, vector<1x16x32xf32>
    tpu.vector_store %arg3[%c0_2, %c0_3, %c0_4], %0 {strides = array<i32>} : memref<1x16x160xf32, #tpu.memory_space<vmem>>, vector<1x16x32xf32>,
    %cst = arith.constant 0.000000e+00 : f32
    %2 = vector.broadcast %cst : f32 to vector<1x32xf32>
    %c0_i32 = arith.constant 0 : i32
    %3 = arith.index_cast %c0_i32 : i32 to index
    %c0_5 = arith.constant 0 : index
    %c0_6 = arith.constant 0 : index
    %4 = vector.load %arg2[%3, %c0_5, %c0_6] : memref<1x16x32xf32, #tpu.memory_space<vmem>>, vector<1x16x32xf32>
    %5 = vector.shape_cast %4 : vector<1x16x32xf32> to vector<16x32xf32>
    %6 = tpu.concatenate %2, %5 in 0 : vector<1x32xf32>, vector<16x32xf32> -> vector<17x32xf32>
    %7 = arith.index_cast %c0_i32 : i32 to index
    %c0_7 = arith.constant 0 : index
    %c0_8 = arith.constant 0 : index
    %8 = vector.load %arg1[%7, %c0_7, %c0_8] : memref<1x16x4xi32, #tpu.memory_space<vmem>>, vector<1x16x4xi32>
    %9 = vector.shape_cast %8 : vector<1x16x4xi32> to vector<16x4xi32>
    %10 = vector.extract_strided_slice %9 {offsets = [0, 0], sizes = [16, 1], strides = [1, 1]} : vector<16x4xi32> to vector<16x1xi32>
    %c1_i32 = arith.constant 1 : i32
    %11 = vector.broadcast %c1_i32 : i32 to vector<16x1xi32>
    %12 = arith.addi %10, %11 : vector<16x1xi32>
    %13 = tpu.iota {dimensions = array<i32: 1>} : vector<16x17xi32>
    %14 = vector.shape_cast %12 : vector<16x1xi32> to vector<16x1xi32>
    %15 = vector.broadcast %14 : vector<16x1xi32> to vector<16x17xi32>
    %16 = arith.cmpi eq, %15, %13 : vector<16x17xi32>
    %17 = arith.extui %16 : vector<16x17xi1> to vector<16x17xi32>
    %18 = arith.sitofp %17 : vector<16x17xi32> to vector<16x17xf32>
    %cst_9 = arith.constant dense<0.000000e+00> : vector<16x32xf32>
    %19 = tpu.matmul %18, %6, %cst_9 {dimension_numbers = #tpu.dot_dimension_numbers<[1], [0], [0], [1], [0, 0, 1, 1], [], []>} : vector<16x17xf32>, vector<17x32xf32>, vector<16x32xf32> -> vector<16x32xf32>
    %20 = arith.index_cast %c0_i32 : i32 to index
    %c0_10 = arith.constant 0 : index
    %c32 = arith.constant 32 : index
    %21 = vector.load %arg3[%20, %c0_10, %c32] : memref<1x16x160xf32, #tpu.memory_space<vmem>>, vector<1x16x32xf32>
    %22 = vector.shape_cast %21 : vector<1x16x32xf32> to vector<16x32xf32>
    %23 = vector.shape_cast %19 : vector<16x32xf32> to vector<1x16x32xf32>
    tpu.vector_store %arg3[%20, %c0_10, %c32], %23 {strides = array<i32>} : memref<1x16x160xf32, #tpu.memory_space<vmem>>, vector<1x16x32xf32>,
    %24 = vector.extract_strided_slice %9 {offsets = [0, 1], sizes = [16, 1], strides = [1, 1]} : vector<16x4xi32> to vector<16x1xi32>
    %c1_i32_11 = arith.constant 1 : i32
    %25 = vector.broadcast %c1_i32_11 : i32 to vector<16x1xi32>
    %26 = arith.addi %24, %25 : vector<16x1xi32>
    %27 = tpu.iota {dimensions = array<i32: 1>} : vector<16x17xi32>
    %28 = vector.shape_cast %26 : vector<16x1xi32> to vector<16x1xi32>
    %29 = vector.broadcast %28 : vector<16x1xi32> to vector<16x17xi32>
    %30 = arith.cmpi eq, %29, %27 : vector<16x17xi32>
    %31 = arith.extui %30 : vector<16x17xi1> to vector<16x17xi32>
    %32 = arith.sitofp %31 : vector<16x17xi32> to vector<16x17xf32>
    %cst_12 = arith.constant dense<0.000000e+00> : vector<16x32xf32>
    %33 = tpu.matmul %32, %6, %cst_12 {dimension_numbers = #tpu.dot_dimension_numbers<[1], [0], [0], [1], [0, 0, 1, 1], [], []>} : vector<16x17xf32>, vector<17x32xf32>, vector<16x32xf32> -> vector<16x32xf32>
    %34 = arith.index_cast %c0_i32 : i32 to index
    %c0_13 = arith.constant 0 : index
    %c64 = arith.constant 64 : index
    %35 = vector.load %arg3[%34, %c0_13, %c64] : memref<1x16x160xf32, #tpu.memory_space<vmem>>, vector<1x16x32xf32>
    %36 = vector.shape_cast %35 : vector<1x16x32xf32> to vector<16x32xf32>
    %37 = vector.shape_cast %33 : vector<16x32xf32> to vector<1x16x32xf32>
    tpu.vector_store %arg3[%34, %c0_13, %c64], %37 {strides = array<i32>} : memref<1x16x160xf32, #tpu.memory_space<vmem>>, vector<1x16x32xf32>,
    %38 = vector.extract_strided_slice %9 {offsets = [0, 2], sizes = [16, 1], strides = [1, 1]} : vector<16x4xi32> to vector<16x1xi32>
    %c1_i32_14 = arith.constant 1 : i32
    %39 = vector.broadcast %c1_i32_14 : i32 to vector<16x1xi32>
    %40 = arith.addi %38, %39 : vector<16x1xi32>
    %41 = tpu.iota {dimensions = array<i32: 1>} : vector<16x17xi32>
    %42 = vector.shape_cast %40 : vector<16x1xi32> to vector<16x1xi32>
    %43 = vector.broadcast %42 : vector<16x1xi32> to vector<16x17xi32>
    %44 = arith.cmpi eq, %43, %41 : vector<16x17xi32>
    %45 = arith.extui %44 : vector<16x17xi1> to vector<16x17xi32>
    %46 = arith.sitofp %45 : vector<16x17xi32> to vector<16x17xf32>
    %cst_15 = arith.constant dense<0.000000e+00> : vector<16x32xf32>
    %47 = tpu.matmul %46, %6, %cst_15 {dimension_numbers = #tpu.dot_dimension_numbers<[1], [0], [0], [1], [0, 0, 1, 1], [], []>} : vector<16x17xf32>, vector<17x32xf32>, vector<16x32xf32> -> vector<16x32xf32>
    %48 = arith.index_cast %c0_i32 : i32 to index
    %c0_16 = arith.constant 0 : index
    %c96 = arith.constant 96 : index
    %49 = vector.load %arg3[%48, %c0_16, %c96] : memref<1x16x160xf32, #tpu.memory_space<vmem>>, vector<1x16x32xf32>
    %50 = vector.shape_cast %49 : vector<1x16x32xf32> to vector<16x32xf32>
    %51 = vector.shape_cast %47 : vector<16x32xf32> to vector<1x16x32xf32>
    tpu.vector_store %arg3[%48, %c0_16, %c96], %51 {strides = array<i32>} : memref<1x16x160xf32, #tpu.memory_space<vmem>>, vector<1x16x32xf32>,
    %52 = vector.extract_strided_slice %9 {offsets = [0, 3], sizes = [16, 1], strides = [1, 1]} : vector<16x4xi32> to vector<16x1xi32>
    %c1_i32_17 = arith.constant 1 : i32
    %53 = vector.broadcast %c1_i32_17 : i32 to vector<16x1xi32>
    %54 = arith.addi %52, %53 : vector<16x1xi32>
    %55 = tpu.iota {dimensions = array<i32: 1>} : vector<16x17xi32>
    %56 = vector.shape_cast %54 : vector<16x1xi32> to vector<16x1xi32>
    %57 = vector.broadcast %56 : vector<16x1xi32> to vector<16x17xi32>
    %58 = arith.cmpi eq, %57, %55 : vector<16x17xi32>
    %59 = arith.extui %58 : vector<16x17xi1> to vector<16x17xi32>
    %60 = arith.sitofp %59 : vector<16x17xi32> to vector<16x17xf32>
    %cst_18 = arith.constant dense<0.000000e+00> : vector<16x32xf32>
    %61 = tpu.matmul %60, %6, %cst_18 {dimension_numbers = #tpu.dot_dimension_numbers<[1], [0], [0], [1], [0, 0, 1, 1], [], []>} : vector<16x17xf32>, vector<17x32xf32>, vector<16x32xf32> -> vector<16x32xf32>
    %62 = arith.index_cast %c0_i32 : i32 to index
    %c0_19 = arith.constant 0 : index
    %c128 = arith.constant 128 : index
    %63 = vector.load %arg3[%62, %c0_19, %c128] : memref<1x16x160xf32, #tpu.memory_space<vmem>>, vector<1x16x32xf32>
    %64 = vector.shape_cast %63 : vector<1x16x32xf32> to vector<16x32xf32>
    %65 = vector.shape_cast %61 : vector<16x32xf32> to vector<1x16x32xf32>
    tpu.vector_store %arg3[%62, %c0_19, %c128], %65 {strides = array<i32>} : memref<1x16x160xf32, #tpu.memory_space<vmem>>, vector<1x16x32xf32>,
    %c1_i32_20 = arith.constant 1 : i32
    return
  }
  func.func @transform_0(%arg0: i32) -> (i32, i32, i32) {
    %c0_i32 = arith.constant 0 : i32
    %c0_i32_0 = arith.constant 0 : i32
    %c0_i32_1 = arith.constant 0 : i32
    return %arg0, %c0_i32, %c0_i32_0 : i32, i32, i32
  }
  func.func @transform_1(%arg0: i32) -> (i32, i32, i32) {
    %c0_i32 = arith.constant 0 : i32
    %c0_i32_0 = arith.constant 0 : i32
    %c0_i32_1 = arith.constant 0 : i32
    return %arg0, %c0_i32, %c0_i32_0 : i32, i32, i32
  }
  func.func @transform_2(%arg0: i32) -> (i32, i32, i32) {
    %c0_i32 = arith.constant 0 : i32
    %c0_i32_0 = arith.constant 0 : i32
    %c0_i32_1 = arith.constant 0 : i32
    return %arg0, %c0_i32, %c0_i32_0 : i32, i32, i32
  }
}

</mosaic_0001>

<llo_original>
// kernel: tpu_custom_call.1
$region0: #{tpu_custom_call.1}
  #allocation0 [shape = 'u32[]', space=smem, size = 0x4, offset = 0x4, fixed_abs, tag = 'smem constant byte address 0x4 - core index']
  #allocation1 [shape = 'u32[72,128]{1,0:T(1,128)}', space=vmem, size = 0x9000, scoped, tag = 'internal scratch']
  %s0 = inlined_call_operand.vmem [shape: s32[2,16,4], index: 0, kind: input, shape index: {}]
  %s1 = inlined_call_operand.vmem [shape: f32[2,16,32], index: 1, kind: input, shape index: {}]
  %s2 = inlined_call_operand.hbm [shape: f32[2,16,160], index: 2, kind: output, shape index: {}]
  %s3 = sld [smem:[#allocation0]]
  $region41: #{tpu_custom_call.1} parent=0
    _
  %s5 = ssub.s32 1, %s3
  %s6 = scalar_select 0, %s5, %s3
  $region1: #{tpu_custom_call.1} parent=0
    #allocation2 [shape = 'u8[32768]{0}', space=vmem, size = 0x8000, scoped, tag = 'output window, operand 0']
    #allocation3 [shape = 's32[2]{0}', space=sflag, size = 0x8, scoped, tag = 'scoped memory for tpu_custom_call.1']
    %7 = vsyncpa [#allocation3], 0
    %s8 = scalar_lea.sflag [#allocation3], 1
    %9 = vsyncpa %s8, 0
    loop: start=0, step=1, limit=4
    $region2: #{tpu_custom_call.1} parent=1 // loop_pre_header
      _
    $region3: #{tpu_custom_call.1} parent=1 // loop_header
      %s11 = sphi 0, %s15
      %p12 = scmp.ge.s32.totalorder %s11, 4
      %s21 = sphi 0, %s23
      %s24 = sphi 0, %s21
      %s25 = sphi 0, %s24
      %s41 = sphi 0, %s25
      %s47 = sphi 0, %s49
      %s50 = sphi 0, %s47
      %s51 = sphi 0, %s50
      %s67 = sphi 0, %s51
      %s73 = sphi 0, %s75
      %s76 = sphi 0, %s73
      %s77 = sphi 0, %s76
      %s93 = sphi 0, %s77
    $region4: #{tpu_custom_call.1} parent=1 // loop_header_branch
      %14 = sbr.rel (%p12) target = $region8
    $region5: #{tpu_custom_call.1} parent=1 // loop_body
      %s16 = ssub.s32 %s11, 1
      %s17 = ssub.s32 %s11, 2
      %s18 = sadd.s32 %s11, 1
      %s19 = ssub.s32 %s11, %s18
      %p20 = scmp.eq.s32.totalorder %s19, 0
      %s22 = sadd.s32 %s21, 1
      %s23 = scalar_select %p20, %s21, %s22
      %p26 = pneg %p20
      %p27 = scmp.eq.s32.totalorder %s11, 1
      %p28 = por %p26, %p27
      %p29 = scmp.ne.s32.totalorder %s21, %s24
      %p30 = scmp.eq.s32.totalorder %s11, 0
      %p31 = por %p29, %p30
      %p32 = scmp.ne.s32.totalorder %s21, %s24
      %p33 = scmp.eq.s32.totalorder %s16, 1
      %p34 = por %p32, %p33
      %p35 = scmp.ne.s32.totalorder %s24, %s25
      %p36 = scmp.eq.s32.totalorder %s16, 0
      %p37 = por %p35, %p36
      %p38 = scmp.ne.s32.totalorder %s24, %s25
      %p39 = scmp.eq.s32.totalorder %s17, 1
      %p40 = por %p38, %p39
      %p42 = scmp.ne.s32.totalorder %s25, %s41
      %p43 = scmp.eq.s32.totalorder %s17, 0
      %p44 = por %p42, %p43
      %s45 = ssub.s32 %s11, %s18
      %p46 = scmp.eq.s32.totalorder %s45, 0
      %s48 = sadd.s32 %s47, 1
      %s49 = scalar_select %p46, %s47, %s48
      %p52 = pneg %p46
      %p53 = scmp.eq.s32.totalorder %s11, 1
      %p54 = por %p52, %p53
      %p55 = scmp.ne.s32.totalorder %s47, %s50
      %p56 = scmp.eq.s32.totalorder %s11, 0
      %p57 = por %p55, %p56
      %p58 = scmp.ne.s32.totalorder %s47, %s50
      %p59 = scmp.eq.s32.totalorder %s16, 1
      %p60 = por %p58, %p59
      %p61 = scmp.ne.s32.totalorder %s50, %s51
      %p62 = scmp.eq.s32.totalorder %s16, 0
      %p63 = por %p61, %p62
      %p64 = scmp.ne.s32.totalorder %s50, %s51
      %p65 = scmp.eq.s32.totalorder %s17, 1
      %p66 = por %p64, %p65
      %p68 = scmp.ne.s32.totalorder %s51, %s67
      %p69 = scmp.eq.s32.totalorder %s17, 0
      %p70 = por %p68, %p69
      %s71 = ssub.s32 %s11, %s18
      %p72 = scmp.eq.s32.totalorder %s71, 0
      %s74 = sadd.s32 %s73, 1
      %s75 = scalar_select %p72, %s73, %s74
      %p78 = pneg %p72
      %p79 = scmp.eq.s32.totalorder %s11, 1
      %p80 = por %p78, %p79
      %p81 = scmp.ne.s32.totalorder %s73, %s76
      %p82 = scmp.eq.s32.totalorder %s11, 0
      %p83 = por %p81, %p82
      %p84 = scmp.ne.s32.totalorder %s73, %s76
      %p85 = scmp.eq.s32.totalorder %s16, 1
      %p86 = por %p84, %p85
      %p87 = scmp.ne.s32.totalorder %s76, %s77
      %p88 = scmp.eq.s32.totalorder %s16, 0
      %p89 = por %p87, %p88
      %p90 = scmp.ne.s32.totalorder %s76, %s77
      %p91 = scmp.eq.s32.totalorder %s17, 1
      %p92 = por %p90, %p91
      %p94 = scmp.ne.s32.totalorder %s77, %s93
      %p95 = scmp.eq.s32.totalorder %s17, 0
      %p96 = por %p94, %p95
      %p97 = scmp.le.s32.totalorder 1, %s11
      %p98 = scmp.lt.s32.totalorder %s11, 3
      %p99 = pnand %p97, %p98
      %p100 = pneg %p99
      // Predicated region
      $region9: #{tpu_custom_call.1} parent=5 // pred_check
        _
      $region10: #{tpu_custom_call.1} parent=5 // pred_check_branch
        %102 = sbr.rel (%p99) target = $region12
      $region11: #{tpu_custom_call.1} parent=5 // pred_region
        %s103 = ssub.s32 %s11, 1
      $region12: #{tpu_custom_call.1} parent=5 // pred_fallthru
        _
      %p104 = scmp.lt.s32.totalorder %s11, 2
      // Predicated region
      $region13: #{tpu_custom_call.1} parent=5 // pred_check
        %p105 = pneg %p104
      $region14: #{tpu_custom_call.1} parent=5 // pred_check_branch
        %107 = sbr.rel (%p105) target = $region16
      $region15: #{tpu_custom_call.1} parent=5 // pred_region
        // Predicated region
        $region17: #{tpu_custom_call.1} parent=15 // pred_check
          %p108 = pneg %p31
        $region18: #{tpu_custom_call.1} parent=15 // pred_check_branch
          %110 = sbr.rel (%p108) target = $region20
        $region19: #{tpu_custom_call.1} parent=15 // pred_region
          %p111 = scmp.lt.s32.totalorder %s11, 1
          %s112 = scalar_select %p111, %s11, 1
          %s113 = smul.addr %s112, 2
          %s114 = smul.addr %s113, 8
          %s115 = scalar_lea.vmem %s0, %s114
        $region20: #{tpu_custom_call.1} parent=15 // pred_fallthru
          _
        // Predicated region
        $region21: #{tpu_custom_call.1} parent=15 // pred_check
          %p116 = pneg %p57
        $region22: #{tpu_custom_call.1} parent=15 // pred_check_branch
          %118 = sbr.rel (%p116) target = $region24
        $region23: #{tpu_custom_call.1} parent=15 // pred_region
          %p119 = scmp.lt.s32.totalorder %s11, 1
          %s120 = scalar_select %p119, %s11, 1
          %s121 = smul.addr %s120, 2
          %s122 = smul.addr %s121, 8
          %s123 = scalar_lea.vmem %s1, %s122
        $region24: #{tpu_custom_call.1} parent=15 // pred_fallthru
          _
      $region16: #{tpu_custom_call.1} parent=5 // pred_fallthru
        _
      %p124 = scmp.le.s32.totalorder 1, %s11
      %p125 = scmp.lt.s32.totalorder %s11, 3
      %p126 = pnand %p124, %p125
      %p127 = pneg %p126
      // Predicated region
      $region25: #{tpu_custom_call.1} parent=5 // pred_check
        _
      $region26: #{tpu_custom_call.1} parent=5 // pred_check_branch
        %129 = sbr.rel (%p126) target = $region28
      $region27: #{tpu_custom_call.1} parent=5 // pred_region
        %s130 = ssub.s32 %s11, 1
        %p131 = scmp.lt.s32.totalorder %s16, 1
        %s132 = scalar_select %p131, %s16, 1
        %s133 = smul.addr %s132, 2
        %s134 = smul.addr %s133, 8
        %s135 = scalar_lea.vmem %s0, %s134
        %p136 = pneg %p37
        %p137 = pneg %p34
        %p138 = scmp.lt.s32.totalorder %s16, 1
        %s139 = scalar_select %p138, %s16, 1
        %s140 = smul.addr %s139, 2
        %s141 = smul.addr %s140, 8
        %s142 = scalar_lea.vmem %s1, %s141
        %p143 = pneg %p63
        %p144 = pneg %p60
        %p145 = pneg %p89
        %p146 = pneg %p86
        %s147 = sand.u32 %s76, 1
        %s148 = scalar_lea.sflag [#allocation3], %s147
        %s149 = sand.u32 %s76, 1
        %s150 = smul.addr %s149, 32
        %s151 = scalar_lea.vmem [#allocation2], %s150
        %p152 = scmp.lt.s32.totalorder %s16, 1
        %s153 = scalar_select %p152, %s16, 1
        %s154 = smul.addr %s153, 2
        %s155 = smul.addr %s154, 8
        %s156 = scalar_lea.vmem %s0, %s155
        %p157 = scmp.lt.s32.totalorder %s16, 1
        %s158 = scalar_select %p157, %s16, 1
        %s159 = smul.addr %s158, 2
        %s160 = smul.addr %s159, 8
        %s161 = scalar_lea.vmem %s1, %s160
        %v162 = vld [vmem:[%s161] sm:$0xff]
        %v163 = vld [vmem:[%s161 + $0x8] sm:$0xff]
        %vm164 = vcmask 261120
        %165 = vst.msk [vmem:[%s151] sm:$0xff] %vm164, %v162
        %166 = vst.msk [vmem:[%s151 + $0x10] sm:$0xff] %vm164, %v163
        %v167 = vld [vmem:[%s161] sm:$0xff]
        %v168 = vld [vmem:[%s161 + $0x8] sm:$0xff]
        %vm171 = vcmask 1040384
        %v172 = vrot.slane %v167, 7
        %v173 = vrot.slane %v168, 7
        %v174 = vsel %vm171, %v172, %v173
        %v177 = vsel %vm171, 0.0, %v172
        %v178 = vld [vmem:[%s156] sm:$0xff]
        %v179 = vld [vmem:[%s156 + $0x8] sm:$0xff]
        %v180 = vadd.s32 %v178, 1
        %v181 = vadd.s32 %v179, 1
        %v182 = vlaneseq
        %v183 = vand.u32 %v182, 127
        %184 = vset.pattern.permute.xlu0 0
        %185 = vperm.xlu0 %184, %v180
        %v186 = vpop.permute.xlu0 %185
        %187 = vset.pattern.permute.xlu0 0
        %188 = vperm.xlu0 %187, %v181
        %v189 = vpop.permute.xlu0 %188
        %vm190 = vcmp.eq.s32.totalorder %v186, %v183
        %vm191 = vcmp.eq.s32.totalorder %v189, %v183
        %v192 = vsel %vm190, 1, 0
        %v193 = vsel %vm191, 1, 0
        %v194 = vcvt.s32.f32 %v192
        %v195 = vcvt.s32.f32 %v193
        %vm196 = vcmask 138240
        %v198 = vsel %vm196, %v194, 0
        %v201 = vsel %vm196, %v195, 0
        %v203 = vsel %vm171, %v173, 0
        %205 = vmatpush.msra.mxu0 0.0
        %206 = vmatpush.msra.mxu0 0.0
        %207 = vmatpush.msra.mxu0 0.0
        %208 = vmatpush.msra.mxu0 0.0
        %209 = vmatpush.msra.mxu0 0.0
        %210 = vmatpush.msra.mxu0 0.0
        %211 = vmatpush.msra.mxu0 0.0
        %212 = vmatpush.msra.mxu0 0.0
        %213 = vmatpush.msra.mxu0 0.0
        %214 = vmatpush.msra.mxu0 0.0
        %215 = vmatpush.msra.mxu0 0.0
        %216 = vmatpush.msra.mxu0 0.0
        %217 = vmatpush.msra.mxu0 0.0
        %218 = vmatpush.msra.mxu0 %v203
        %219 = vmatpush.msra.mxu0 %v174
        %220 = vmatpush.msra.mxu0 %v177
        %221 = vmatmul.f32.gmra.mxu0 %v198
        %v222 = vpop.f32.mrf.mxu0
        %v223 = vadd.f32 0.0, %v222
        %224 = vmatmul.f32.gmra.mxu0 %v201
        %v225 = vpop.f32.mrf.mxu0
        %v226 = vadd.f32 0.0, %v225
        %227 = vdwg.mxu0
        %230 = vrot.lane.b32.xlu0 %v223, 32
        %v231 = vpop.permute.xlu0 %230
        %232 = vrot.lane.b32.xlu0 %v226, 32
        %v233 = vpop.permute.xlu0 %232
        %vm236 = vcmask 523520
        %237 = vst.msk [vmem:[%s151] sm:$0xff] %vm236, %v231
        %238 = vst.msk [vmem:[%s151 + $0x10] sm:$0xff] %vm236, %v233
        %239 = vset.pattern.permute.xlu0 1
        %240 = vperm.xlu0 %239, %v180
        %v241 = vpop.permute.xlu0 %240
        %242 = vset.pattern.permute.xlu0 1
        %243 = vperm.xlu0 %242, %v181
        %v244 = vpop.permute.xlu0 %243
        %vm245 = vcmp.eq.s32.totalorder %v241, %v183
        %vm246 = vcmp.eq.s32.totalorder %v244, %v183
        %v247 = vsel %vm245, 1, 0
        %v248 = vsel %vm246, 1, 0
        %v249 = vcvt.s32.f32 %v247
        %v250 = vcvt.s32.f32 %v248
        %v252 = vsel %vm196, %v249, 0
        %v255 = vsel %vm196, %v250, 0
        %257 = vmatpush.msra.mxu0 0.0
        %258 = vmatpush.msra.mxu0 0.0
        %259 = vmatpush.msra.mxu0 0.0
        %260 = vmatpush.msra.mxu0 0.0
        %261 = vmatpush.msra.mxu0 0.0
        %262 = vmatpush.msra.mxu0 0.0
        %263 = vmatpush.msra.mxu0 0.0
        %264 = vmatpush.msra.mxu0 0.0
        %265 = vmatpush.msra.mxu0 0.0
        %266 = vmatpush.msra.mxu0 0.0
        %267 = vmatpush.msra.mxu0 0.0
        %268 = vmatpush.msra.mxu0 0.0
        %269 = vmatpush.msra.mxu0 0.0
        %270 = vmatpush.msra.mxu0 %v203
        %271 = vmatpush.msra.mxu0 %v174
        %272 = vmatpush.msra.mxu0 %v177
        %273 = vmatmul.f32.gmra.mxu0 %v252
        %v274 = vpop.f32.mrf.mxu0
        %v275 = vadd.f32 0.0, %v274
        %276 = vmatmul.f32.gmra.mxu0 %v255
        %v277 = vpop.f32.mrf.mxu0
        %v278 = vadd.f32 0.0, %v277
        %279 = vdwg.mxu0
        %282 = vrot.lane.b32.xlu0 %v275, 64
        %v283 = vpop.permute.xlu0 %282
        %284 = vrot.lane.b32.xlu0 %v278, 64
        %v285 = vpop.permute.xlu0 %284
        %vm288 = vcmask 785920
        %289 = vst.msk [vmem:[%s151] sm:$0xff] %vm288, %v283
        %290 = vst.msk [vmem:[%s151 + $0x10] sm:$0xff] %vm288, %v285
        %291 = vset.pattern.permute.xlu0 2
        %292 = vperm.xlu0 %291, %v180
        %v293 = vpop.permute.xlu0 %292
        %294 = vset.pattern.permute.xlu0 2
        %295 = vperm.xlu0 %294, %v181
        %v296 = vpop.permute.xlu0 %295
        %vm297 = vcmp.eq.s32.totalorder %v293, %v183
        %vm298 = vcmp.eq.s32.totalorder %v296, %v183
        %v299 = vsel %vm297, 1, 0
        %v300 = vsel %vm298, 1, 0
        %v301 = vcvt.s32.f32 %v299
        %v302 = vcvt.s32.f32 %v300
        %v304 = vsel %vm196, %v301, 0
        %v307 = vsel %vm196, %v302, 0
        %309 = vmatpush.msra.mxu0 0.0
        %310 = vmatpush.msra.mxu0 0.0
        %311 = vmatpush.msra.mxu0 0.0
        %312 = vmatpush.msra.mxu0 0.0
        %313 = vmatpush.msra.mxu0 0.0
        %314 = vmatpush.msra.mxu0 0.0
        %315 = vmatpush.msra.mxu0 0.0
        %316 = vmatpush.msra.mxu0 0.0
        %317 = vmatpush.msra.mxu0 0.0
        %318 = vmatpush.msra.mxu0 0.0
        %319 = vmatpush.msra.mxu0 0.0
        %320 = vmatpush.msra.mxu0 0.0
        %321 = vmatpush.msra.mxu0 0.0
        %322 = vmatpush.msra.mxu0 %v203
        %323 = vmatpush.msra.mxu0 %v174
        %324 = vmatpush.msra.mxu0 %v177
        %325 = vmatmul.f32.gmra.mxu0 %v304
        %v326 = vpop.f32.mrf.mxu0
        %v327 = vadd.f32 0.0, %v326
        %328 = vmatmul.f32.gmra.mxu0 %v307
        %v329 = vpop.f32.mrf.mxu0
        %v330 = vadd.f32 0.0, %v329
        %331 = vdwg.mxu0
        %334 = vrot.lane.b32.xlu0 %v327, 96
        %v335 = vpop.permute.xlu0 %334
        %336 = vrot.lane.b32.xlu0 %v330, 96
        %v337 = vpop.permute.xlu0 %336
        %vm340 = vcmask 1048320
        %341 = vst.msk [vmem:[%s151] sm:$0xff] %vm340, %v335
        %342 = vst.msk [vmem:[%s151 + $0x10] sm:$0xff] %vm340, %v337
        %343 = vset.pattern.permute.xlu0 3
        %344 = vperm.xlu0 %343, %v180
        %v345 = vpop.permute.xlu0 %344
        %346 = vset.pattern.permute.xlu0 3
        %347 = vperm.xlu0 %346, %v181
        %v348 = vpop.permute.xlu0 %347
        %vm349 = vcmp.eq.s32.totalorder %v345, %v183
        %vm350 = vcmp.eq.s32.totalorder %v348, %v183
        %v351 = vsel %vm349, 1, 0
        %v352 = vsel %vm350, 1, 0
        %v353 = vcvt.s32.f32 %v351
        %v354 = vcvt.s32.f32 %v352
        %v356 = vsel %vm196, %v353, 0
        %v359 = vsel %vm196, %v354, 0
        %361 = vmatpush.msra.mxu0 0.0
        %362 = vmatpush.msra.mxu0 0.0
        %363 = vmatpush.msra.mxu0 0.0
        %364 = vmatpush.msra.mxu0 0.0
        %365 = vmatpush.msra.mxu0 0.0
        %366 = vmatpush.msra.mxu0 0.0
        %367 = vmatpush.msra.mxu0 0.0
        %368 = vmatpush.msra.mxu0 0.0
        %369 = vmatpush.msra.mxu0 0.0
        %370 = vmatpush.msra.mxu0 0.0
        %371 = vmatpush.msra.mxu0 0.0
        %372 = vmatpush.msra.mxu0 0.0
        %373 = vmatpush.msra.mxu0 0.0
        %374 = vmatpush.msra.mxu0 %v203
        %375 = vmatpush.msra.mxu0 %v174
        %376 = vmatpush.msra.mxu0 %v177
        %377 = vmatmul.f32.gmra.mxu0 %v356
        %v378 = vpop.f32.mrf.mxu0
        %v379 = vadd.f32 0.0, %v378
        %380 = vmatmul.f32.gmra.mxu0 %v359
        %v381 = vpop.f32.mrf.mxu0
        %v382 = vadd.f32 0.0, %v381
        %383 = vdwg.mxu0
        %384 = vst.msk [vmem:[%s151 + $0x8] sm:$0xff] %vm164, %v379
        %385 = vst.msk [vmem:[%s151 + $0x18] sm:$0xff] %vm164, %v382
        %s386 = sand.u32 %s76, 1
        %s387 = scalar_lea.sflag [#allocation3], %s386
        %s388 = sand.u32 %s76, 1
        %s389 = smul.addr %s388, 32
        %s390 = scalar_lea.vmem [#allocation2], %s389
        // Predicated region
        $region29: #{tpu_custom_call.1} parent=27 // pred_check
          %p391 = pneg %p86
        $region30: #{tpu_custom_call.1} parent=27 // pred_check_branch
          %393 = sbr.rel (%p391) target = $region32
        $region31: #{tpu_custom_call.1} parent=27 // pred_region
          %395 = vsyncadd %s387, 0
          %s396 = smul.addr %s16, 4
          %s397 = smul.addr %s396, 8
          %s398 = scalar_lea.hbm %s2, %s397
          %s399 = sshll.u32 %s390, 4
          %s400 = int_to_ptr.vmem [resolvable:$true] %s399
          %s401 = sshll.u32 %s398, 4
          %s402 = int_to_ptr.hbm [resolvable:$true] %s401
          %407 = dma.vmem_to_hbm [thread:$0]  %s400, 512, %s402, %s387, 256, 256, 16
        $region32: #{tpu_custom_call.1} parent=27 // pred_fallthru
          _
      $region28: #{tpu_custom_call.1} parent=5 // pred_fallthru
        _
      %p408 = scmp.le.s32.totalorder 2, %s11
      // Predicated region
      $region33: #{tpu_custom_call.1} parent=5 // pred_check
        %p409 = pneg %p408
      $region34: #{tpu_custom_call.1} parent=5 // pred_check_branch
        %411 = sbr.rel (%p409) target = $region36
      $region35: #{tpu_custom_call.1} parent=5 // pred_region
        %s412 = ssub.s32 %s11, 2
        // Predicated region
        $region37: #{tpu_custom_call.1} parent=35 // pred_check
          %p413 = pneg %p92
        $region38: #{tpu_custom_call.1} parent=35 // pred_check_branch
          %415 = sbr.rel (%p413) target = $region40
        $region39: #{tpu_custom_call.1} parent=35 // pred_region
          %s416 = sand.u32 %s77, 1
          %s417 = scalar_lea.sflag [#allocation3], %s416
          %s418 = sand.u32 %s77, 1
          %s419 = smul.addr %s418, 32
          %s420 = scalar_lea.vmem [#allocation2], %s419
          %422 = dma.done %s417, 512
        $region40: #{tpu_custom_call.1} parent=35 // pred_fallthru
          _
      $region36: #{tpu_custom_call.1} parent=5 // pred_fallthru
        _
    $region6: #{tpu_custom_call.1} parent=1 // loop_footer
      %s15 = sadd.s32 1, %s11
    $region7: #{tpu_custom_call.1} parent=1 // loop_footer_branch
      %10 = sbr.rel target = $region3
    $region8: #{tpu_custom_call.1} parent=1 // loop_exit
      _
    %423 = vsyncpa [#allocation3], 1
    %s424 = scalar_lea.sflag [#allocation3], 1
    %425 = vsyncpa %s424, 1

</llo_original>
